<compile_context>
chip_gen: v6e
topology: v6e:2x2x1
jax: 0.10.0
libtpu: 0.0.40
codegen_flags: <defaults>
</compile_context>

<pallas_src>
import jax
import jax.numpy as jnp
from jax import lax
from jax.experimental import pallas as pl
from jax.experimental.pallas import tpu as pltpu

N_PARALLEL = 2
LN_EPS = 1e-5


def critic_kernel(obs_ref, act_ref,
                  w_tr_ref, b_tr_ref, gamma_ref, beta_ref,
                  w1h_ref, w1a_ref, b1_ref, w2_ref, b2_ref, w3_ref, b3_ref,
                  out_ref):
    obs = obs_ref[...]            # (bm, repr_dim)
    act = act_ref[...]            # (bm, A)

    # ---- trunk: Linear -> LayerNorm -> Tanh ----
    z = jnp.dot(obs, w_tr_ref[...], preferred_element_type=jnp.float32) + b_tr_ref[...]
    inv_feat = 1.0 / z.shape[-1]
    mu = jnp.sum(z, axis=-1, keepdims=True) * inv_feat
    ms = jnp.sum(z * z, axis=-1, keepdims=True) * inv_feat
    var = ms - mu * mu
    h = jnp.tanh((z - mu) * lax.rsqrt(var + LN_EPS) * gamma_ref[...] + beta_ref[...])

    # ---- QS: both ensemble members folded into the output (N) dimension ----
    # cat([h, action], -1) @ W1  ==  h @ W1_h + action @ W1_a     (pre-split in wrapper)
    x = (jnp.dot(h, w1h_ref[...], preferred_element_type=jnp.float32)
         + jnp.dot(act, w1a_ref[...], preferred_element_type=jnp.float32)
         + b1_ref[...])                                           # (bm, 2*hidden)
    x = jnp.maximum(x, 0.0)
    x = jnp.dot(x, w2_ref[...], preferred_element_type=jnp.float32) + b2_ref[...]
    x = jnp.maximum(x, 0.0)
    # (2*hidden, 2) block-diag W3 produces both heads' scalars side by side
    out_ref[...] = jnp.dot(x, w3_ref[...], preferred_element_type=jnp.float32) + b3_ref[...]


def _block_diag2(a, b):
    """Block-diagonal of two 2-D arrays (avoids any scipy dependency)."""
    (ra, ca), (rb, cb) = a.shape, b.shape
    top = jnp.concatenate([a, jnp.zeros((ra, cb), a.dtype)], axis=1)
    bot = jnp.concatenate([jnp.zeros((rb, ca), b.dtype), b], axis=1)
    return jnp.concatenate([top, bot], axis=0)


def _merge_params(params, feat):
    """Fold the n_parallel=2 ensemble into the matmul output dimension (wrapper-side)."""
    (w_tr, b_tr, gamma, beta, w1, b1, w2, b2, w3, b3) = params
    # W1: (2, feat+A, hidden) -> h-part (feat, 2*hidden) and action-part (A, 2*hidden)
    w1h = jnp.concatenate([w1[p, :feat, :] for p in range(N_PARALLEL)], axis=-1)
    w1a = jnp.concatenate([w1[p, feat:, :] for p in range(N_PARALLEL)], axis=-1)
    b1m = jnp.concatenate([b1[p] for p in range(N_PARALLEL)], axis=-1)       # (1, 2*hidden)
    w2m = _block_diag2(w2[0], w2[1])                                         # (2h, 2h)
    b2m = jnp.concatenate([b2[p] for p in range(N_PARALLEL)], axis=-1)       # (1, 2*hidden)
    w3m = _block_diag2(w3[0], w3[1])                                         # (2h, 2)
    b3m = jnp.concatenate([b3[p] for p in range(N_PARALLEL)], axis=-1)       # (1, 2)
    return (w_tr, b_tr, gamma, beta, w1h, w1a, b1m, w2m, b2m, w3m, b3m)


def critic_forward(obs, action, params, *, block_m=128):
    B, repr_dim = obs.shape
    A = action.shape[1]
    w_tr = params[0]
    feat = w_tr.shape[1]
    hidden = params[4].shape[-1]

    merged = _merge_params(params, feat)

    bm = min(B, block_m)
    grid = (pl.cdiv(B, bm),)

    def batch_map(i):
        return (i, 0)

    def rep_map(i):          # weights/biases: same (only) block every step
        return (0, 0)

    in_specs = [pl.BlockSpec((bm, repr_dim), batch_map),
                pl.BlockSpec((bm, A), batch_map)]
    in_specs += [pl.BlockSpec(p.shape, rep_map) for p in merged]
    out_specs = pl.BlockSpec((bm, N_PARALLEL), batch_map)

    flops = 2 * B * (repr_dim * feat
                     + N_PARALLEL * ((feat + A) * hidden + hidden * hidden + hidden))
    bytes_accessed = 4 * (obs.size + action.size
                          + sum(int(p.size) for p in merged) + B * N_PARALLEL)
    cost = pl.CostEstimate(flops=flops,
                           transcendentals=B * feat,
                           bytes_accessed=bytes_accessed)

    return pl.pallas_call(
        critic_kernel,
        out_shape=jax.ShapeDtypeStruct((B, N_PARALLEL), jnp.float32),
        grid=grid,
        in_specs=in_specs,
        out_specs=out_specs,
        compiler_params=pltpu.CompilerParams(dimension_semantics=("parallel",)),
        cost_estimate=cost,
    )(obs, action, *merged)


def reference_forward(obs, action, params):
    (w_tr, b_tr, gamma, beta, w1, b1, w2, b2, w3, b3) = params
    z = obs @ w_tr + b_tr
    mu = z.mean(-1, keepdims=True)
    var = ((z - mu) ** 2).mean(-1, keepdims=True)
    h = jnp.tanh(((z - mu) / jnp.sqrt(var + LN_EPS)) * gamma + beta)
    ha = jnp.concatenate([h, action], axis=-1)              # (B, feat+A)
    x = jnp.broadcast_to(ha, (N_PARALLEL,) + ha.shape)       # (2, B, feat+A)
    x = jnp.maximum(jnp.einsum('pbi,pio->pbo', x, w1) + b1, 0.0)
    x = jnp.maximum(jnp.einsum('pbi,pio->pbo', x, w2) + b2, 0.0)
    q = jnp.einsum('pbi,pio->pbo', x, w3) + b3               # (2, B, 1)
    return jnp.squeeze(jnp.swapaxes(q, 0, 1), axis=-1)       # (B, 2)


def init_params(key, repr_dim, feature_dim, action_dim, hidden_dim):
    ks = jax.random.split(key, 4)
    w_tr = 0.1 * jax.random.normal(ks[0], (repr_dim, feature_dim), jnp.float32)
    b_tr = jnp.zeros((1, feature_dim), jnp.float32)
    gamma = jnp.ones((1, feature_dim), jnp.float32)
    beta = jnp.zeros((1, feature_dim), jnp.float32)
    w1 = 0.1 * jax.random.normal(ks[1], (N_PARALLEL, feature_dim + action_dim, hidden_dim), jnp.float32)
    b1 = jnp.zeros((N_PARALLEL, 1, hidden_dim), jnp.float32)
    w2 = 0.1 * jax.random.normal(ks[2], (N_PARALLEL, hidden_dim, hidden_dim), jnp.float32)
    b2 = jnp.zeros((N_PARALLEL, 1, hidden_dim), jnp.float32)
    w3 = 0.1 * jax.random.normal(ks[3], (N_PARALLEL, hidden_dim, 1), jnp.float32)
    b3 = jnp.zeros((N_PARALLEL, 1, 1), jnp.float32)
    return (w_tr, b_tr, gamma, beta, w1, b1, w2, b2, w3, b3)


if __name__ == "__main__":
    B, repr_dim, feature_dim, action_dim, hidden_dim = 8, 64, 32, 4, 32

    key = jax.random.PRNGKey(0)
    k_obs, k_act, k_par, k_obs2, k_act2 = jax.random.split(key, 5)
    obs = jax.random.normal(k_obs, (B, repr_dim), jnp.float32)
    action = jax.random.normal(k_act, (B, action_dim), jnp.float32)
    params = init_params(k_par, repr_dim, feature_dim, action_dim, hidden_dim)

    out = jax.block_until_ready(critic_forward(obs, action, params))
    ref = reference_forward(obs, action, params)
    assert out.shape == (B, N_PARALLEL)
    assert jnp.allclose(out, ref, atol=1e-5, rtol=1e-5), (out, ref)

    # Larger batch: exercises the multi-step parallel batch grid (megacore path on v7x).
    B2 = 256
    obs2 = jax.random.normal(k_obs2, (B2, repr_dim), jnp.float32)
    act2 = jax.random.normal(k_act2, (B2, action_dim), jnp.float32)
    out2 = jax.block_until_ready(critic_forward(obs2, act2, params))
    ref2 = reference_forward(obs2, act2, params)
    assert out2.shape == (B2, N_PARALLEL)
    assert jnp.allclose(out2, ref2, atol=1e-5, rtol=1e-5), (out2, ref2)

    print("KERNEL_OK")
</pallas_src>

<mosaic_0001>
module attributes {stable_mosaic.version = 11 : i64} {
  func.func @critic_kernel(%arg0: i32, %arg1: memref<8x64xf32, #tpu.memory_space<vmem>>, %arg2: memref<8x4xf32, #tpu.memory_space<vmem>>, %arg3: memref<64x32xf32, #tpu.memory_space<vmem>>, %arg4: memref<1x32xf32, #tpu.memory_space<vmem>>, %arg5: memref<1x32xf32, #tpu.memory_space<vmem>>, %arg6: memref<1x32xf32, #tpu.memory_space<vmem>>, %arg7: memref<32x64xf32, #tpu.memory_space<vmem>>, %arg8: memref<4x64xf32, #tpu.memory_space<vmem>>, %arg9: memref<1x64xf32, #tpu.memory_space<vmem>>, %arg10: memref<64x64xf32, #tpu.memory_space<vmem>>, %arg11: memref<1x64xf32, #tpu.memory_space<vmem>>, %arg12: memref<64x2xf32, #tpu.memory_space<vmem>>, %arg13: memref<1x2xf32, #tpu.memory_space<vmem>>, %arg14: memref<8x2xf32, #tpu.memory_space<vmem>>) attributes {dimension_semantics = [#tpu.dimension_semantics<parallel>], iteration_bounds = array<i64: 1>, scalar_prefetch = 0 : i64, scratch_operands = 0 : i64, tpu.core_type = #tpu.core_type<tc>, window_params = [{transform_indices = @transform_0, window_bounds = array<i64: 8, 64>}, {transform_indices = @transform_1, window_bounds = array<i64: 8, 4>}, {pipeline_mode = #tpu.pipeline_mode<synchronous>, transform_indices = @transform_2, window_bounds = array<i64: 64, 32>}, {pipeline_mode = #tpu.pipeline_mode<synchronous>, transform_indices = @transform_3, window_bounds = array<i64: 1, 32>}, {pipeline_mode = #tpu.pipeline_mode<synchronous>, transform_indices = @transform_4, window_bounds = array<i64: 1, 32>}, {pipeline_mode = #tpu.pipeline_mode<synchronous>, transform_indices = @transform_5, window_bounds = array<i64: 1, 32>}, {pipeline_mode = #tpu.pipeline_mode<synchronous>, transform_indices = @transform_6, window_bounds = array<i64: 32, 64>}, {pipeline_mode = #tpu.pipeline_mode<synchronous>, transform_indices = @transform_7, window_bounds = array<i64: 4, 64>}, {pipeline_mode = #tpu.pipeline_mode<synchronous>, transform_indices = @transform_8, window_bounds = array<i64: 1, 64>}, {pipeline_mode = #tpu.pipeline_mode<synchronous>, transform_indices = @transform_9, window_bounds = array<i64: 64, 64>}, {pipeline_mode = #tpu.pipeline_mode<synchronous>, transform_indices = @transform_10, window_bounds = array<i64: 1, 64>}, {pipeline_mode = #tpu.pipeline_mode<synchronous>, transform_indices = @transform_11, window_bounds = array<i64: 64, 2>}, {pipeline_mode = #tpu.pipeline_mode<synchronous>, transform_indices = @transform_12, window_bounds = array<i64: 1, 2>}, {transform_indices = @transform_13, window_bounds = array<i64: 8, 2>}]} {
    %c0 = arith.constant 0 : index
    %c0_0 = arith.constant 0 : index
    %0 = vector.load %arg1[%c0, %c0_0] : memref<8x64xf32, #tpu.memory_space<vmem>>, vector<8x64xf32>
    %c0_1 = arith.constant 0 : index
    %c0_2 = arith.constant 0 : index
    %1 = vector.load %arg2[%c0_1, %c0_2] : memref<8x4xf32, #tpu.memory_space<vmem>>, vector<8x4xf32>
    %c0_3 = arith.constant 0 : index
    %c0_4 = arith.constant 0 : index
    %2 = vector.load %arg3[%c0_3, %c0_4] : memref<64x32xf32, #tpu.memory_space<vmem>>, vector<64x32xf32>
    %cst = arith.constant dense<0.000000e+00> : vector<8x32xf32>
    %3 = tpu.matmul %0, %2, %cst {dimension_numbers = #tpu.dot_dimension_numbers<[1], [0], [0], [1], [0, 0, 1, 1], [], []>} : vector<8x64xf32>, vector<64x32xf32>, vector<8x32xf32> -> vector<8x32xf32>
    %c0_5 = arith.constant 0 : index
    %c0_6 = arith.constant 0 : index
    %4 = vector.load %arg4[%c0_5, %c0_6] : memref<1x32xf32, #tpu.memory_space<vmem>>, vector<1x32xf32>
    %5 = vector.broadcast %4 : vector<1x32xf32> to vector<8x32xf32>
    %6 = arith.addf %3, %5 : vector<8x32xf32>
    %cst_7 = arith.constant dense<0.000000e+00> : vector<8xf32>
    %7 = vector.multi_reduction <add>, %6, %cst_7 [1] : vector<8x32xf32> to vector<8xf32>
    %8 = vector.shape_cast %7 : vector<8xf32> to vector<8x1xf32>
    %cst_8 = arith.constant 3.125000e-02 : f32
    %9 = vector.broadcast %cst_8 : f32 to vector<8x1xf32>
    %10 = arith.mulf %8, %9 : vector<8x1xf32>
    %11 = arith.mulf %6, %6 : vector<8x32xf32>
    %cst_9 = arith.constant dense<0.000000e+00> : vector<8xf32>
    %12 = vector.multi_reduction <add>, %11, %cst_9 [1] : vector<8x32xf32> to vector<8xf32>
    %13 = vector.shape_cast %12 : vector<8xf32> to vector<8x1xf32>
    %cst_10 = arith.constant 3.125000e-02 : f32
    %14 = vector.broadcast %cst_10 : f32 to vector<8x1xf32>
    %15 = arith.mulf %13, %14 : vector<8x1xf32>
    %16 = arith.mulf %10, %10 : vector<8x1xf32>
    %17 = arith.subf %15, %16 : vector<8x1xf32>
    %18 = vector.broadcast %10 : vector<8x1xf32> to vector<8x32xf32>
    %19 = arith.subf %6, %18 : vector<8x32xf32>
    %cst_11 = arith.constant 9.99999974E-6 : f32
    %20 = vector.broadcast %cst_11 : f32 to vector<8x1xf32>
    %21 = arith.addf %17, %20 : vector<8x1xf32>
    %22 = math.rsqrt %21 : vector<8x1xf32>
    %23 = vector.broadcast %22 : vector<8x1xf32> to vector<8x32xf32>
    %24 = arith.mulf %19, %23 : vector<8x32xf32>
    %c0_12 = arith.constant 0 : index
    %c0_13 = arith.constant 0 : index
    %25 = vector.load %arg5[%c0_12, %c0_13] : memref<1x32xf32, #tpu.memory_space<vmem>>, vector<1x32xf32>
    %26 = vector.broadcast %25 : vector<1x32xf32> to vector<8x32xf32>
    %27 = arith.mulf %24, %26 : vector<8x32xf32>
    %c0_14 = arith.constant 0 : index
    %c0_15 = arith.constant 0 : index
    %28 = vector.load %arg6[%c0_14, %c0_15] : memref<1x32xf32, #tpu.memory_space<vmem>>, vector<1x32xf32>
    %29 = vector.broadcast %28 : vector<1x32xf32> to vector<8x32xf32>
    %30 = arith.addf %27, %29 : vector<8x32xf32>
    %31 = math.tanh %30 : vector<8x32xf32>
    %c0_16 = arith.constant 0 : index
    %c0_17 = arith.constant 0 : index
    %32 = vector.load %arg7[%c0_16, %c0_17] : memref<32x64xf32, #tpu.memory_space<vmem>>, vector<32x64xf32>
    %cst_18 = arith.constant dense<0.000000e+00> : vector<8x64xf32>
    %33 = tpu.matmul %31, %32, %cst_18 {dimension_numbers = #tpu.dot_dimension_numbers<[1], [0], [0], [1], [0, 0, 1, 1], [], []>} : vector<8x32xf32>, vector<32x64xf32>, vector<8x64xf32> -> vector<8x64xf32>
    %c0_19 = arith.constant 0 : index
    %c0_20 = arith.constant 0 : index
    %34 = vector.load %arg8[%c0_19, %c0_20] : memref<4x64xf32, #tpu.memory_space<vmem>>, vector<4x64xf32>
    %cst_21 = arith.constant dense<0.000000e+00> : vector<8x64xf32>
    %35 = tpu.matmul %1, %34, %cst_21 {dimension_numbers = #tpu.dot_dimension_numbers<[1], [0], [0], [1], [0, 0, 1, 1], [], []>} : vector<8x4xf32>, vector<4x64xf32>, vector<8x64xf32> -> vector<8x64xf32>
    %36 = arith.addf %33, %35 : vector<8x64xf32>
    %c0_22 = arith.constant 0 : index
    %c0_23 = arith.constant 0 : index
    %37 = vector.load %arg9[%c0_22, %c0_23] : memref<1x64xf32, #tpu.memory_space<vmem>>, vector<1x64xf32>
    %38 = vector.broadcast %37 : vector<1x64xf32> to vector<8x64xf32>
    %39 = arith.addf %36, %38 : vector<8x64xf32>
    %cst_24 = arith.constant 0.000000e+00 : f32
    %40 = vector.broadcast %cst_24 : f32 to vector<8x64xf32>
    %41 = arith.maximumf %39, %40 : vector<8x64xf32>
    %c0_25 = arith.constant 0 : index
    %c0_26 = arith.constant 0 : index
    %42 = vector.load %arg10[%c0_25, %c0_26] : memref<64x64xf32, #tpu.memory_space<vmem>>, vector<64x64xf32>
    %cst_27 = arith.constant dense<0.000000e+00> : vector<8x64xf32>
    %43 = tpu.matmul %41, %42, %cst_27 {dimension_numbers = #tpu.dot_dimension_numbers<[1], [0], [0], [1], [0, 0, 1, 1], [], []>} : vector<8x64xf32>, vector<64x64xf32>, vector<8x64xf32> -> vector<8x64xf32>
    %c0_28 = arith.constant 0 : index
    %c0_29 = arith.constant 0 : index
    %44 = vector.load %arg11[%c0_28, %c0_29] : memref<1x64xf32, #tpu.memory_space<vmem>>, vector<1x64xf32>
    %45 = vector.broadcast %44 : vector<1x64xf32> to vector<8x64xf32>
    %46 = arith.addf %43, %45 : vector<8x64xf32>
    %cst_30 = arith.constant 0.000000e+00 : f32
    %47 = vector.broadcast %cst_30 : f32 to vector<8x64xf32>
    %48 = arith.maximumf %46, %47 : vector<8x64xf32>
    %c0_31 = arith.constant 0 : index
    %c0_32 = arith.constant 0 : index
    %49 = vector.load %arg12[%c0_31, %c0_32] : memref<64x2xf32, #tpu.memory_space<vmem>>, vector<64x2xf32>
    %cst_33 = arith.constant dense<0.000000e+00> : vector<8x2xf32>
    %50 = tpu.matmul %48, %49, %cst_33 {dimension_numbers = #tpu.dot_dimension_numbers<[1], [0], [0], [1], [0, 0, 1, 1], [], []>} : vector<8x64xf32>, vector<64x2xf32>, vector<8x2xf32> -> vector<8x2xf32>
    %c0_34 = arith.constant 0 : index
    %c0_35 = arith.constant 0 : index
    %51 = vector.load %arg13[%c0_34, %c0_35] : memref<1x2xf32, #tpu.memory_space<vmem>>, vector<1x2xf32>
    %52 = vector.broadcast %51 : vector<1x2xf32> to vector<8x2xf32>
    %53 = arith.addf %50, %52 : vector<8x2xf32>
    %c0_36 = arith.constant 0 : index
    %c0_37 = arith.constant 0 : index
    %54 = vector.load %arg14[%c0_36, %c0_37] : memref<8x2xf32, #tpu.memory_space<vmem>>, vector<8x2xf32>
    tpu.vector_store %arg14[%c0_36, %c0_37], %53 {strides = array<i32>} : memref<8x2xf32, #tpu.memory_space<vmem>>, vector<8x2xf32>,
    return
  }
  func.func @transform_0(%arg0: i32) -> (i32, i32) {
    %c0_i32 = arith.constant 0 : i32
    %c0_i32_0 = arith.constant 0 : i32
    return %arg0, %c0_i32 : i32, i32
  }
  func.func @transform_1(%arg0: i32) -> (i32, i32) {
    %c0_i32 = arith.constant 0 : i32
    %c0_i32_0 = arith.constant 0 : i32
    return %arg0, %c0_i32 : i32, i32
  }
  func.func @transform_2(%arg0: i32) -> (i32, i32) {
    %c0_i32 = arith.constant 0 : i32
    %c0_i32_0 = arith.constant 0 : i32
    %c0_i32_1 = arith.constant 0 : i32
    return %c0_i32, %c0_i32_0 : i32, i32
  }
  func.func @transform_3(%arg0: i32) -> (i32, i32) {
    %c0_i32 = arith.constant 0 : i32
    %c0_i32_0 = arith.constant 0 : i32
    %c0_i32_1 = arith.constant 0 : i32
    return %c0_i32, %c0_i32_0 : i32, i32
  }
  func.func @transform_4(%arg0: i32) -> (i32, i32) {
    %c0_i32 = arith.constant 0 : i32
    %c0_i32_0 = arith.constant 0 : i32
    %c0_i32_1 = arith.constant 0 : i32
    return %c0_i32, %c0_i32_0 : i32, i32
  }
  func.func @transform_5(%arg0: i32) -> (i32, i32) {
    %c0_i32 = arith.constant 0 : i32
    %c0_i32_0 = arith.constant 0 : i32
    %c0_i32_1 = arith.constant 0 : i32
    return %c0_i32, %c0_i32_0 : i32, i32
  }
  func.func @transform_6(%arg0: i32) -> (i32, i32) {
    %c0_i32 = arith.constant 0 : i32
    %c0_i32_0 = arith.constant 0 : i32
    %c0_i32_1 = arith.constant 0 : i32
    return %c0_i32, %c0_i32_0 : i32, i32
  }
  func.func @transform_7(%arg0: i32) -> (i32, i32) {
    %c0_i32 = arith.constant 0 : i32
    %c0_i32_0 = arith.constant 0 : i32
    %c0_i32_1 = arith.constant 0 : i32
    return %c0_i32, %c0_i32_0 : i32, i32
  }
  func.func @transform_8(%arg0: i32) -> (i32, i32) {
    %c0_i32 = arith.constant 0 : i32
    %c0_i32_0 = arith.constant 0 : i32
    %c0_i32_1 = arith.constant 0 : i32
    return %c0_i32, %c0_i32_0 : i32, i32
  }
  func.func @transform_9(%arg0: i32) -> (i32, i32) {
    %c0_i32 = arith.constant 0 : i32
    %c0_i32_0 = arith.constant 0 : i32
    %c0_i32_1 = arith.constant 0 : i32
    return %c0_i32, %c0_i32_0 : i32, i32
  }
  func.func @transform_10(%arg0: i32) -> (i32, i32) {
    %c0_i32 = arith.constant 0 : i32
    %c0_i32_0 = arith.constant 0 : i32
    %c0_i32_1 = arith.constant 0 : i32
    return %c0_i32, %c0_i32_0 : i32, i32
  }
  func.func @transform_11(%arg0: i32) -> (i32, i32) {
    %c0_i32 = arith.constant 0 : i32
    %c0_i32_0 = arith.constant 0 : i32
    %c0_i32_1 = arith.constant 0 : i32
    return %c0_i32, %c0_i32_0 : i32, i32
  }
  func.func @transform_12(%arg0: i32) -> (i32, i32) {
    %c0_i32 = arith.constant 0 : i32
    %c0_i32_0 = arith.constant 0 : i32
    %c0_i32_1 = arith.constant 0 : i32
    return %c0_i32, %c0_i32_0 : i32, i32
  }
  func.func @transform_13(%arg0: i32) -> (i32, i32) {
    %c0_i32 = arith.constant 0 : i32
    %c0_i32_0 = arith.constant 0 : i32
    return %arg0, %c0_i32 : i32, i32
  }
}

</mosaic_0001>

<llo_original>
// kernel: tpu_custom_call.1
$region0: #{tpu_custom_call.1}
  #allocation0 [shape = 'u32[]', space=smem, size = 0x4, offset = 0x4, fixed_abs, tag = 'smem constant byte address 0x4 - core index']
  #allocation1 [shape = 'u32[144,128]{1,0:T(1,128)}', space=vmem, size = 0x12000, scoped, tag = 'internal scratch']
  %s0 = inlined_call_operand.vmem [shape: f32[8,64], index: 0, kind: input, shape index: {}]
  %s1 = inlined_call_operand.vmem [shape: f32[8,4], index: 1, kind: input, shape index: {}]
  %s2 = inlined_call_operand.vmem [shape: f32[64,32], index: 2, kind: input, shape index: {}]
  %s3 = inlined_call_operand.vmem [shape: f32[1,32], index: 3, kind: input, shape index: {}]
  %s4 = inlined_call_operand.vmem [shape: f32[1,32], index: 4, kind: input, shape index: {}]
  %s5 = inlined_call_operand.vmem [shape: f32[1,32], index: 5, kind: input, shape index: {}]
  %s6 = inlined_call_operand.vmem [shape: f32[32,64], index: 6, kind: input, shape index: {}]
  %s7 = inlined_call_operand.vmem [shape: f32[4,64], index: 7, kind: input, shape index: {}]
  %s8 = inlined_call_operand.vmem [shape: f32[1,64], index: 8, kind: input, shape index: {}]
  %s9 = inlined_call_operand.vmem [shape: f32[64,64], index: 9, kind: input, shape index: {}]
  %s10 = inlined_call_operand.vmem [shape: f32[1,64], index: 10, kind: input, shape index: {}]
  %s11 = inlined_call_operand.vmem [shape: f32[64,2], index: 11, kind: input, shape index: {}]
  %s12 = inlined_call_operand.vmem [shape: f32[1,2], index: 12, kind: input, shape index: {}]
  %s13 = inlined_call_operand.vmem [shape: f32[8,2], index: 13, kind: output, shape index: {}]
  %s14 = sld [smem:[#allocation0]]
  $region62: #{tpu_custom_call.1} parent=0
    _
  %s16 = ssub.s32 1, %s14
  %s17 = scalar_select 0, %s16, %s14
  // Predicated region
  $region2: #{tpu_custom_call.1} parent=0 // pred_check
    _
  $region3: #{tpu_custom_call.1} parent=0 // pred_check_branch
    %19 = sbr.rel (0) target = $region5
  $region4: #{tpu_custom_call.1} parent=0 // pred_region
    _
  $region5: #{tpu_custom_call.1} parent=0 // pred_fallthru
    _
  // Predicated region
  $region6: #{tpu_custom_call.1} parent=0 // pred_check
    _
  $region7: #{tpu_custom_call.1} parent=0 // pred_check_branch
    %21 = sbr.rel (0) target = $region9
  $region8: #{tpu_custom_call.1} parent=0 // pred_region
    _
  $region9: #{tpu_custom_call.1} parent=0 // pred_fallthru
    _
  // Predicated region
  $region10: #{tpu_custom_call.1} parent=0 // pred_check
    _
  $region11: #{tpu_custom_call.1} parent=0 // pred_check_branch
    %23 = sbr.rel (0) target = $region13
  $region12: #{tpu_custom_call.1} parent=0 // pred_region
    _
  $region13: #{tpu_custom_call.1} parent=0 // pred_fallthru
    _
  // Predicated region
  $region14: #{tpu_custom_call.1} parent=0 // pred_check
    _
  $region15: #{tpu_custom_call.1} parent=0 // pred_check_branch
    %25 = sbr.rel (0) target = $region17
  $region16: #{tpu_custom_call.1} parent=0 // pred_region
    _
  $region17: #{tpu_custom_call.1} parent=0 // pred_fallthru
    _
  // Predicated region
  $region18: #{tpu_custom_call.1} parent=0 // pred_check
    _
  $region19: #{tpu_custom_call.1} parent=0 // pred_check_branch
    %27 = sbr.rel (0) target = $region21
  $region20: #{tpu_custom_call.1} parent=0 // pred_region
    _
  $region21: #{tpu_custom_call.1} parent=0 // pred_fallthru
    _
  // Predicated region
  $region22: #{tpu_custom_call.1} parent=0 // pred_check
    _
  $region23: #{tpu_custom_call.1} parent=0 // pred_check_branch
    %29 = sbr.rel (0) target = $region25
  $region24: #{tpu_custom_call.1} parent=0 // pred_region
    _
  $region25: #{tpu_custom_call.1} parent=0 // pred_fallthru
    _
  // Predicated region
  $region26: #{tpu_custom_call.1} parent=0 // pred_check
    _
  $region27: #{tpu_custom_call.1} parent=0 // pred_check_branch
    %31 = sbr.rel (0) target = $region29
  $region28: #{tpu_custom_call.1} parent=0 // pred_region
    _
  $region29: #{tpu_custom_call.1} parent=0 // pred_fallthru
    _
  // Predicated region
  $region30: #{tpu_custom_call.1} parent=0 // pred_check
    _
  $region31: #{tpu_custom_call.1} parent=0 // pred_check_branch
    %33 = sbr.rel (0) target = $region33
  $region32: #{tpu_custom_call.1} parent=0 // pred_region
    _
  $region33: #{tpu_custom_call.1} parent=0 // pred_fallthru
    _
  // Predicated region
  $region34: #{tpu_custom_call.1} parent=0 // pred_check
    _
  $region35: #{tpu_custom_call.1} parent=0 // pred_check_branch
    %35 = sbr.rel (0) target = $region37
  $region36: #{tpu_custom_call.1} parent=0 // pred_region
    _
  $region37: #{tpu_custom_call.1} parent=0 // pred_fallthru
    _
  // Predicated region
  $region38: #{tpu_custom_call.1} parent=0 // pred_check
    _
  $region39: #{tpu_custom_call.1} parent=0 // pred_check_branch
    %37 = sbr.rel (0) target = $region41
  $region40: #{tpu_custom_call.1} parent=0 // pred_region
    _
  $region41: #{tpu_custom_call.1} parent=0 // pred_fallthru
    _
  // Predicated region
  $region42: #{tpu_custom_call.1} parent=0 // pred_check
    _
  $region43: #{tpu_custom_call.1} parent=0 // pred_check_branch
    %39 = sbr.rel (0) target = $region45
  $region44: #{tpu_custom_call.1} parent=0 // pred_region
    _
  $region45: #{tpu_custom_call.1} parent=0 // pred_fallthru
    _
  // Predicated region
  $region46: #{tpu_custom_call.1} parent=0 // pred_check
    _
  $region47: #{tpu_custom_call.1} parent=0 // pred_check_branch
    %41 = sbr.rel (0) target = $region49
  $region48: #{tpu_custom_call.1} parent=0 // pred_region
    _
  $region49: #{tpu_custom_call.1} parent=0 // pred_fallthru
    _
  // Predicated region
  $region50: #{tpu_custom_call.1} parent=0 // pred_check
    _
  $region51: #{tpu_custom_call.1} parent=0 // pred_check_branch
    %43 = sbr.rel (0) target = $region53
  $region52: #{tpu_custom_call.1} parent=0 // pred_region
    _
  $region53: #{tpu_custom_call.1} parent=0 // pred_fallthru
    _
  %v44 = vld [vmem:[%s0] sm:$0xff]
  %v45 = vld [vmem:[%s1] sm:$0xff]
  %v46 = vld [vmem:[%s2] sm:$0xff]
  %v47 = vld [vmem:[%s2 + $0x8] sm:$0xff]
  %v48 = vld [vmem:[%s2 + $0x10] sm:$0xff]
  %v49 = vld [vmem:[%s2 + $0x18] sm:$0xff]
  %v50 = vld [vmem:[%s2 + $0x20] sm:$0xff]
  %v51 = vld [vmem:[%s2 + $0x28] sm:$0xff]
  %v52 = vld [vmem:[%s2 + $0x30] sm:$0xff]
  %v53 = vld [vmem:[%s2 + $0x38] sm:$0xff]
  %v54 = vld [vmem:[%s3] sm:$0x1]
  %v56 = vlaneseq
  %v57 = vshrl.u32 %v56, 7
  %v58 = vsub.s32 0, %v57
  %v59 = vrot.slane %v54, %v58
  %vm61 = vcmask 523264
  %v63 = vsel %vm61, %v44, 0
  %65 = vmatprep.subr.mxu0 0.0
  %66 = vmatpush1.msra.mxu0 0.0
  %67 = vmatprep.subr.mxu0 0.0
  %68 = vmatpush1.msra.mxu0 0.0
  %69 = vmatprep.subr.mxu0 0.0
  %70 = vmatpush1.msra.mxu0 0.0
  %71 = vmatprep.subr.mxu0 0.0
  %72 = vmatpush1.msra.mxu0 0.0
  %73 = vmatprep.subr.mxu0 0.0
  %74 = vmatpush1.msra.mxu0 0.0
  %75 = vmatprep.subr.mxu0 0.0
  %76 = vmatpush1.msra.mxu0 0.0
  %77 = vmatprep.subr.mxu0 0.0
  %78 = vmatpush1.msra.mxu0 0.0
  %79 = vmatprep.subr.mxu0 0.0
  %80 = vmatpush1.msra.mxu0 0.0
  %81 = vmatprep.subr.mxu0 0.0
  %82 = vmatpush1.msra.mxu0 %v53
  %83 = vmatprep.subr.mxu0 0.0
  %84 = vmatpush1.msra.mxu0 %v52
  %85 = vmatprep.subr.mxu0 0.0
  %86 = vmatpush1.msra.mxu0 %v51
  %87 = vmatprep.subr.mxu0 0.0
  %88 = vmatpush1.msra.mxu0 %v50
  %89 = vmatprep.subr.mxu0 0.0
  %90 = vmatpush1.msra.mxu0 %v49
  %91 = vmatprep.subr.mxu0 0.0
  %92 = vmatpush1.msra.mxu0 %v48
  %93 = vmatprep.subr.mxu0 0.0
  %94 = vmatpush1.msra.mxu0 %v47
  %95 = vmatprep.subr.mxu0 0.0
  %96 = vmatpush1.msra.mxu0 %v46
  %97 = vmatprep.subr.mxu0 0.0
  %98 = vmatpush2.msra.mxu0 0.0
  %99 = vmatprep.subr.mxu0 0.0
  %100 = vmatpush2.msra.mxu0 0.0
  %101 = vmatprep.subr.mxu0 0.0
  %102 = vmatpush2.msra.mxu0 0.0
  %103 = vmatprep.subr.mxu0 0.0
  %104 = vmatpush2.msra.mxu0 0.0
  %105 = vmatprep.subr.mxu0 0.0
  %106 = vmatpush2.msra.mxu0 0.0
  %107 = vmatprep.subr.mxu0 0.0
  %108 = vmatpush2.msra.mxu0 0.0
  %109 = vmatprep.subr.mxu0 0.0
  %110 = vmatpush2.msra.mxu0 0.0
  %111 = vmatprep.subr.mxu0 0.0
  %112 = vmatpush2.msra.mxu0 0.0
  %113 = vmatprep.subr.mxu0 0.0
  %114 = vmatpush2.msra.mxu0 0.0
  %115 = vmatprep.subr.mxu0 0.0
  %116 = vmatpush2.msra.mxu0 0.0
  %117 = vmatprep.subr.mxu0 0.0
  %118 = vmatpush2.msra.mxu0 0.0
  %119 = vmatprep.subr.mxu0 0.0
  %120 = vmatpush2.msra.mxu0 0.0
  %121 = vmatprep.subr.mxu0 0.0
  %122 = vmatpush2.msra.mxu0 0.0
  %123 = vmatprep.subr.mxu0 0.0
  %124 = vmatpush2.msra.mxu0 0.0
  %125 = vmatprep.subr.mxu0 0.0
  %126 = vmatpush2.msra.mxu0 0.0
  %127 = vmatprep.subr.mxu0 0.0
  %128 = vmatpush2.msra.mxu0 0.0
  %129 = vmatprep.mubr.f32.mxu0 0.0
  %130 = vmatmul.mubr.f32.gmra.mxu0 %v63
  %v131 = vpop.f32.mrf.mxu0
  %v132 = vadd.f32 %v59, %v131
  %v133 = vpop.f32.mrf.mxu0
  %134 = vdwg.mxu0
  %vm135 = vcmask 261120
  %v136 = vsel %vm135, %v132, 0.0
  %137 = vadd.xlane.f32.xlu0 %v136
  %v138 = vpop.xlane.xlu0 %137
  %v139 = vmul.f32 %v138, 0.03125
  %v140 = vmul.f32 %v132, %v132
  %v141 = vsel %vm135, %v140, 0.0
  %142 = vadd.xlane.f32.xlu0 %v141
  %v143 = vpop.xlane.xlu0 %142
  %v144 = vmul.f32 %v143, 0.03125
  %v145 = vmul.f32 %v139, %v139
  %v146 = vsub.f32 %v144, %v145
  %v147 = vsub.f32 %v132, %v139
  %v148 = vadd.f32 %v146, 1e-05
  %v149 = vrsqrt.pop %v148
  %v150 = vmul.f32 %v147, %v149
  %v151 = vld [vmem:[%s4] sm:$0x1]
  %v153 = vlaneseq
  %v154 = vshrl.u32 %v153, 7
  %v155 = vsub.s32 0, %v154
  %v156 = vrot.slane %v151, %v155
  %v158 = vmul.f32 %v150, %v156
  %v159 = vld [vmem:[%s5] sm:$0x1]
  %v161 = vlaneseq
  %v162 = vshrl.u32 %v161, 7
  %v163 = vsub.s32 0, %v162
  %v164 = vrot.slane %v159, %v163
  %v166 = vadd.f32 %v158, %v164
  %v167 = vtanh.pop %v166
  %v168 = vld [vmem:[%s6] sm:$0xff]
  %v169 = vld [vmem:[%s6 + $0x8] sm:$0xff]
  %v170 = vld [vmem:[%s6 + $0x10] sm:$0xff]
  %v171 = vld [vmem:[%s6 + $0x18] sm:$0xff]
  %v172 = vld [vmem:[%s7] sm:$0xf]
  %vm173 = vcmask 31744
  %v175 = vsel %vm173, %v45, 0
  %vm177 = vcmask 1043456
  %v179 = vsel %vm177, %v172, 0
  %181 = vmatprep.subr.mxu0 0.0
  %182 = vmatpush1.msra.mxu0 0.0
  %183 = vmatprep.subr.mxu0 0.0
  %184 = vmatpush1.msra.mxu0 0.0
  %185 = vmatprep.subr.mxu0 0.0
  %186 = vmatpush1.msra.mxu0 0.0
  %187 = vmatprep.subr.mxu0 0.0
  %188 = vmatpush1.msra.mxu0 0.0
  %189 = vmatprep.subr.mxu0 0.0
  %190 = vmatpush1.msra.mxu0 0.0
  %191 = vmatprep.subr.mxu0 0.0
  %192 = vmatpush1.msra.mxu0 0.0
  %193 = vmatprep.subr.mxu0 0.0
  %194 = vmatpush1.msra.mxu0 0.0
  %195 = vmatprep.subr.mxu0 0.0
  %196 = vmatpush1.msra.mxu0 0.0
  %197 = vmatprep.subr.mxu0 0.0
  %198 = vmatpush1.msra.mxu0 0.0
  %199 = vmatprep.subr.mxu0 0.0
  %200 = vmatpush1.msra.mxu0 0.0
  %201 = vmatprep.subr.mxu0 0.0
  %202 = vmatpush1.msra.mxu0 0.0
  %203 = vmatprep.subr.mxu0 0.0
  %204 = vmatpush1.msra.mxu0 0.0
  %205 = vmatprep.subr.mxu0 0.0
  %206 = vmatpush1.msra.mxu0 0.0
  %207 = vmatprep.subr.mxu0 0.0
  %208 = vmatpush1.msra.mxu0 0.0
  %209 = vmatprep.subr.mxu0 0.0
  %210 = vmatpush1.msra.mxu0 0.0
  %211 = vmatprep.subr.mxu0 0.0
  %212 = vmatpush1.msra.mxu0 %v179
  %213 = vmatprep.subr.mxu0 0.0
  %214 = vmatpush2.msra.mxu0 0.0
  %215 = vmatprep.subr.mxu0 0.0
  %216 = vmatpush2.msra.mxu0 0.0
  %217 = vmatprep.subr.mxu0 0.0
  %218 = vmatpush2.msra.mxu0 0.0
  %219 = vmatprep.subr.mxu0 0.0
  %220 = vmatpush2.msra.mxu0 0.0
  %221 = vmatprep.subr.mxu0 0.0
  %222 = vmatpush2.msra.mxu0 0.0
  %223 = vmatprep.subr.mxu0 0.0
  %224 = vmatpush2.msra.mxu0 0.0
  %225 = vmatprep.subr.mxu0 0.0
  %226 = vmatpush2.msra.mxu0 0.0
  %227 = vmatprep.subr.mxu0 0.0
  %228 = vmatpush2.msra.mxu0 0.0
  %229 = vmatprep.subr.mxu0 0.0
  %230 = vmatpush2.msra.mxu0 0.0
  %231 = vmatprep.subr.mxu0 0.0
  %232 = vmatpush2.msra.mxu0 0.0
  %233 = vmatprep.subr.mxu0 0.0
  %234 = vmatpush2.msra.mxu0 0.0
  %235 = vmatprep.subr.mxu0 0.0
  %236 = vmatpush2.msra.mxu0 0.0
  %237 = vmatprep.subr.mxu0 0.0
  %238 = vmatpush2.msra.mxu0 0.0
  %239 = vmatprep.subr.mxu0 0.0
  %240 = vmatpush2.msra.mxu0 0.0
  %241 = vmatprep.subr.mxu0 0.0
  %242 = vmatpush2.msra.mxu0 0.0
  %243 = vmatprep.subr.mxu0 0.0
  %244 = vmatpush2.msra.mxu0 0.0
  %245 = vmatprep.mubr.f32.mxu0 0.0
  %246 = vmatmul.mubr.f32.gmra.mxu0 %v175
  %v247 = vpop.f32.mrf.mxu0
  %v248 = vadd.f32 0.0, %v247
  %v249 = vpop.f32.mrf.mxu0
  %250 = vdwg.mxu0
  %v252 = vsel %vm135, %v167, 0
  %254 = vmatprep.subr.mxu0 0.0
  %255 = vmatpush1.msra.mxu0 0.0
  %256 = vmatprep.subr.mxu0 0.0
  %257 = vmatpush1.msra.mxu0 0.0
  %258 = vmatprep.subr.mxu0 0.0
  %259 = vmatpush1.msra.mxu0 0.0
  %260 = vmatprep.subr.mxu0 0.0
  %261 = vmatpush1.msra.mxu0 0.0
  %262 = vmatprep.subr.mxu0 0.0
  %263 = vmatpush1.msra.mxu0 0.0
  %264 = vmatprep.subr.mxu0 0.0
  %265 = vmatpush1.msra.mxu0 0.0
  %266 = vmatprep.subr.mxu0 0.0
  %267 = vmatpush1.msra.mxu0 0.0
  %268 = vmatprep.subr.mxu0 0.0
  %269 = vmatpush1.msra.mxu0 0.0
  %270 = vmatprep.subr.mxu0 0.0
  %271 = vmatpush1.msra.mxu0 0.0
  %272 = vmatprep.subr.mxu0 0.0
  %273 = vmatpush1.msra.mxu0 0.0
  %274 = vmatprep.subr.mxu0 0.0
  %275 = vmatpush1.msra.mxu0 0.0
  %276 = vmatprep.subr.mxu0 0.0
  %277 = vmatpush1.msra.mxu0 0.0
  %278 = vmatprep.subr.mxu0 0.0
  %279 = vmatpush1.msra.mxu0 %v171
  %280 = vmatprep.subr.mxu0 0.0
  %281 = vmatpush1.msra.mxu0 %v170
  %282 = vmatprep.subr.mxu0 0.0
  %283 = vmatpush1.msra.mxu0 %v169
  %284 = vmatprep.subr.mxu0 0.0
  %285 = vmatpush1.msra.mxu0 %v168
  %286 = vmatprep.subr.mxu0 0.0
  %287 = vmatpush2.msra.mxu0 0.0
  %288 = vmatprep.subr.mxu0 0.0
  %289 = vmatpush2.msra.mxu0 0.0
  %290 = vmatprep.subr.mxu0 0.0
  %291 = vmatpush2.msra.mxu0 0.0
  %292 = vmatprep.subr.mxu0 0.0
  %293 = vmatpush2.msra.mxu0 0.0
  %294 = vmatprep.subr.mxu0 0.0
  %295 = vmatpush2.msra.mxu0 0.0
  %296 = vmatprep.subr.mxu0 0.0
  %297 = vmatpush2.msra.mxu0 0.0
  %298 = vmatprep.subr.mxu0 0.0
  %299 = vmatpush2.msra.mxu0 0.0
  %300 = vmatprep.subr.mxu0 0.0
  %301 = vmatpush2.msra.mxu0 0.0
  %302 = vmatprep.subr.mxu0 0.0
  %303 = vmatpush2.msra.mxu0 0.0
  %304 = vmatprep.subr.mxu0 0.0
  %305 = vmatpush2.msra.mxu0 0.0
  %306 = vmatprep.subr.mxu0 0.0
  %307 = vmatpush2.msra.mxu0 0.0
  %308 = vmatprep.subr.mxu0 0.0
  %309 = vmatpush2.msra.mxu0 0.0
  %310 = vmatprep.subr.mxu0 0.0
  %311 = vmatpush2.msra.mxu0 0.0
  %312 = vmatprep.subr.mxu0 0.0
  %313 = vmatpush2.msra.mxu0 0.0
  %314 = vmatprep.subr.mxu0 0.0
  %315 = vmatpush2.msra.mxu0 0.0
  %316 = vmatprep.subr.mxu0 0.0
  %317 = vmatpush2.msra.mxu0 0.0
  %318 = vmatprep.mubr.f32.mxu0 0.0
  %319 = vmatmul.mubr.f32.gmra.mxu0 %v252
  %v320 = vpop.f32.mrf.mxu0
  %v321 = vadd.f32 %v248, %v320
  %v322 = vpop.f32.mrf.mxu0
  %323 = vdwg.mxu0
  %v324 = vld [vmem:[%s8] sm:$0x1]
  %v326 = vlaneseq
  %v327 = vshrl.u32 %v326, 7
  %v328 = vsub.s32 0, %v327
  %v329 = vrot.slane %v324, %v328
  %v331 = vadd.f32 %v321, %v329
  %v332 = vmax.f32 %v331, 0.0
  %v333 = vld [vmem:[%s9] sm:$0xff]
  %v334 = vld [vmem:[%s9 + $0x8] sm:$0xff]
  %v335 = vld [vmem:[%s9 + $0x10] sm:$0xff]
  %v336 = vld [vmem:[%s9 + $0x18] sm:$0xff]
  %v337 = vld [vmem:[%s9 + $0x20] sm:$0xff]
  %v338 = vld [vmem:[%s9 + $0x28] sm:$0xff]
  %v339 = vld [vmem:[%s9 + $0x30] sm:$0xff]
  %v340 = vld [vmem:[%s9 + $0x38] sm:$0xff]
  %v341 = vld [vmem:[%s10] sm:$0x1]
  %v343 = vlaneseq
  %v344 = vshrl.u32 %v343, 7
  %v345 = vsub.s32 0, %v344
  %v346 = vrot.slane %v341, %v345
  %v349 = vsel %vm61, %v332, 0
  %351 = vmatprep.subr.mxu0 0.0
  %352 = vmatpush1.msra.mxu0 0.0
  %353 = vmatprep.subr.mxu0 0.0
  %354 = vmatpush1.msra.mxu0 0.0
  %355 = vmatprep.subr.mxu0 0.0
  %356 = vmatpush1.msra.mxu0 0.0
  %357 = vmatprep.subr.mxu0 0.0
  %358 = vmatpush1.msra.mxu0 0.0
  %359 = vmatprep.subr.mxu0 0.0
  %360 = vmatpush1.msra.mxu0 0.0
  %361 = vmatprep.subr.mxu0 0.0
  %362 = vmatpush1.msra.mxu0 0.0
  %363 = vmatprep.subr.mxu0 0.0
  %364 = vmatpush1.msra.mxu0 0.0
  %365 = vmatprep.subr.mxu0 0.0
  %366 = vmatpush1.msra.mxu0 0.0
  %367 = vmatprep.subr.mxu0 0.0
  %368 = vmatpush1.msra.mxu0 %v340
  %369 = vmatprep.subr.mxu0 0.0
  %370 = vmatpush1.msra.mxu0 %v339
  %371 = vmatprep.subr.mxu0 0.0
  %372 = vmatpush1.msra.mxu0 %v338
  %373 = vmatprep.subr.mxu0 0.0
  %374 = vmatpush1.msra.mxu0 %v337
  %375 = vmatprep.subr.mxu0 0.0
  %376 = vmatpush1.msra.mxu0 %v336
  %377 = vmatprep.subr.mxu0 0.0
  %378 = vmatpush1.msra.mxu0 %v335
  %379 = vmatprep.subr.mxu0 0.0
  %380 = vmatpush1.msra.mxu0 %v334
  %381 = vmatprep.subr.mxu0 0.0
  %382 = vmatpush1.msra.mxu0 %v333
  %383 = vmatprep.subr.mxu0 0.0
  %384 = vmatpush2.msra.mxu0 0.0
  %385 = vmatprep.subr.mxu0 0.0
  %386 = vmatpush2.msra.mxu0 0.0
  %387 = vmatprep.subr.mxu0 0.0
  %388 = vmatpush2.msra.mxu0 0.0
  %389 = vmatprep.subr.mxu0 0.0
  %390 = vmatpush2.msra.mxu0 0.0
  %391 = vmatprep.subr.mxu0 0.0
  %392 = vmatpush2.msra.mxu0 0.0
  %393 = vmatprep.subr.mxu0 0.0
  %394 = vmatpush2.msra.mxu0 0.0
  %395 = vmatprep.subr.mxu0 0.0
  %396 = vmatpush2.msra.mxu0 0.0
  %397 = vmatprep.subr.mxu0 0.0
  %398 = vmatpush2.msra.mxu0 0.0
  %399 = vmatprep.subr.mxu0 0.0
  %400 = vmatpush2.msra.mxu0 0.0
  %401 = vmatprep.subr.mxu0 0.0
  %402 = vmatpush2.msra.mxu0 0.0
  %403 = vmatprep.subr.mxu0 0.0
  %404 = vmatpush2.msra.mxu0 0.0
  %405 = vmatprep.subr.mxu0 0.0
  %406 = vmatpush2.msra.mxu0 0.0
  %407 = vmatprep.subr.mxu0 0.0
  %408 = vmatpush2.msra.mxu0 0.0
  %409 = vmatprep.subr.mxu0 0.0
  %410 = vmatpush2.msra.mxu0 0.0
  %411 = vmatprep.subr.mxu0 0.0
  %412 = vmatpush2.msra.mxu0 0.0
  %413 = vmatprep.subr.mxu0 0.0
  %414 = vmatpush2.msra.mxu0 0.0
  %415 = vmatprep.mubr.f32.mxu0 0.0
  %416 = vmatmul.mubr.f32.gmra.mxu0 %v349
  %v417 = vpop.f32.mrf.mxu0
  %v418 = vadd.f32 %v346, %v417
  %v419 = vpop.f32.mrf.mxu0
  %420 = vdwg.mxu0
  %v421 = vmax.f32 %v418, 0.0
  %v422 = vld [vmem:[%s11] sm:$0xff]
  %v423 = vld [vmem:[%s11 + $0x8] sm:$0xff]
  %v424 = vld [vmem:[%s11 + $0x10] sm:$0xff]
  %v425 = vld [vmem:[%s11 + $0x18] sm:$0xff]
  %v426 = vld [vmem:[%s11 + $0x20] sm:$0xff]
  %v427 = vld [vmem:[%s11 + $0x28] sm:$0xff]
  %v428 = vld [vmem:[%s11 + $0x30] sm:$0xff]
  %v429 = vld [vmem:[%s11 + $0x38] sm:$0xff]
  %v430 = vld [vmem:[%s12] sm:$0x1]
  %v432 = vlaneseq
  %v433 = vshrl.u32 %v432, 7
  %v434 = vsub.s32 0, %v433
  %v435 = vrot.slane %v430, %v434
  %v438 = vsel %vm61, %v421, 0
  %440 = vmatprep.subr.mxu0 0.0
  %441 = vmatpush1.msra.mxu0 0.0
  %442 = vmatprep.subr.mxu0 0.0
  %443 = vmatpush1.msra.mxu0 0.0
  %444 = vmatprep.subr.mxu0 0.0
  %445 = vmatpush1.msra.mxu0 0.0
  %446 = vmatprep.subr.mxu0 0.0
  %447 = vmatpush1.msra.mxu0 0.0
  %448 = vmatprep.subr.mxu0 0.0
  %449 = vmatpush1.msra.mxu0 0.0
  %450 = vmatprep.subr.mxu0 0.0
  %451 = vmatpush1.msra.mxu0 0.0
  %452 = vmatprep.subr.mxu0 0.0
  %453 = vmatpush1.msra.mxu0 0.0
  %454 = vmatprep.subr.mxu0 0.0
  %455 = vmatpush1.msra.mxu0 0.0
  %456 = vmatprep.subr.mxu0 0.0
  %457 = vmatpush1.msra.mxu0 %v429
  %458 = vmatprep.subr.mxu0 0.0
  %459 = vmatpush1.msra.mxu0 %v428
  %460 = vmatprep.subr.mxu0 0.0
  %461 = vmatpush1.msra.mxu0 %v427
  %462 = vmatprep.subr.mxu0 0.0
  %463 = vmatpush1.msra.mxu0 %v426
  %464 = vmatprep.subr.mxu0 0.0
  %465 = vmatpush1.msra.mxu0 %v425
  %466 = vmatprep.subr.mxu0 0.0
  %467 = vmatpush1.msra.mxu0 %v424
  %468 = vmatprep.subr.mxu0 0.0
  %469 = vmatpush1.msra.mxu0 %v423
  %470 = vmatprep.subr.mxu0 0.0
  %471 = vmatpush1.msra.mxu0 %v422
  %472 = vmatprep.subr.mxu0 0.0
  %473 = vmatpush2.msra.mxu0 0.0
  %474 = vmatprep.subr.mxu0 0.0
  %475 = vmatpush2.msra.mxu0 0.0
  %476 = vmatprep.subr.mxu0 0.0
  %477 = vmatpush2.msra.mxu0 0.0
  %478 = vmatprep.subr.mxu0 0.0
  %479 = vmatpush2.msra.mxu0 0.0
  %480 = vmatprep.subr.mxu0 0.0
  %481 = vmatpush2.msra.mxu0 0.0
  %482 = vmatprep.subr.mxu0 0.0
  %483 = vmatpush2.msra.mxu0 0.0
  %484 = vmatprep.subr.mxu0 0.0
  %485 = vmatpush2.msra.mxu0 0.0
  %486 = vmatprep.subr.mxu0 0.0
  %487 = vmatpush2.msra.mxu0 0.0
  %488 = vmatprep.subr.mxu0 0.0
  %489 = vmatpush2.msra.mxu0 0.0
  %490 = vmatprep.subr.mxu0 0.0
  %491 = vmatpush2.msra.mxu0 0.0
  %492 = vmatprep.subr.mxu0 0.0
  %493 = vmatpush2.msra.mxu0 0.0
  %494 = vmatprep.subr.mxu0 0.0
  %495 = vmatpush2.msra.mxu0 0.0
  %496 = vmatprep.subr.mxu0 0.0
  %497 = vmatpush2.msra.mxu0 0.0
  %498 = vmatprep.subr.mxu0 0.0
  %499 = vmatpush2.msra.mxu0 0.0
  %500 = vmatprep.subr.mxu0 0.0
  %501 = vmatpush2.msra.mxu0 0.0
  %502 = vmatprep.subr.mxu0 0.0
  %503 = vmatpush2.msra.mxu0 0.0
  %504 = vmatprep.mubr.f32.mxu0 0.0
  %505 = vmatmul.mubr.f32.gmra.mxu0 %v438
  %v506 = vpop.f32.mrf.mxu0
  %v507 = vadd.f32 %v435, %v506
  %v508 = vpop.f32.mrf.mxu0
  %509 = vdwg.mxu0
  %vm510 = vcmask 15360
  %511 = vst.msk [vmem:[%s13] sm:$0xff] %vm510, %v507
  // Predicated region
  $region54: #{tpu_custom_call.1} parent=0 // pred_check
    _
  $region55: #{tpu_custom_call.1} parent=0 // pred_check_branch
    %513 = sbr.rel (0) target = $region57
  $region56: #{tpu_custom_call.1} parent=0 // pred_region
    _
  $region57: #{tpu_custom_call.1} parent=0 // pred_fallthru
    _
  // Predicated region
  $region58: #{tpu_custom_call.1} parent=0 // pred_check
    _
  $region59: #{tpu_custom_call.1} parent=0 // pred_check_branch
    %515 = sbr.rel (0) target = $region61
  $region60: #{tpu_custom_call.1} parent=0 // pred_region
    _
  $region61: #{tpu_custom_call.1} parent=0 // pred_fallthru
    _

</llo_original>
